<compile_context>
chip_gen: v7x
topology: tpu7x:2x2x1
jax: 0.10.0
libtpu: 0.0.40
codegen_flags: <defaults>
</compile_context>

<pallas_src>
import functools

import jax
import jax.numpy as jnp
from jax.experimental import pallas as pl
from jax.experimental.pallas import tpu as pltpu

NUM_CLASSES = 2          # np.unique(load_breast_cancer().target).shape[0]
LANES = 128
_SUBLANES = 8
_MAX_TILE_ROWS = 2048    # (1 in + 2 out) * 2048*128*4 B * 2 (dbl-buf) ~= 6 MiB
_MIN_PALLAS_BATCH = 4096  # below this, the fused XLA affine wins outright


def _linear_kernel(w_ref, b_ref, x_ref, o_ref):
    """o[c] = x * w[c] + b[c]  -- VPU broadcast multiply-add, no MXU/XLU."""
    x = x_ref[...]                      # [tile_rows, 128] f32
    for c in range(o_ref.shape[0]):     # static (num_classes=2) -> unrolled
        o_ref[c] = x * w_ref[c] + b_ref[c]


def _round_up(v, m):
    return ((v + m - 1) // m) * m


def _pick_tile_rows(rows, max_rows_per_block):
    """Sublane-row tile size: big tiles for roofline, >=2 blocks for v7x TCs."""
    if rows <= _SUBLANES:
        return rows                      # single full-extent block
    max_rows = max(_SUBLANES, (max_rows_per_block // _SUBLANES) * _SUBLANES)
    if rows <= 2 * max_rows:
        # Split into (at most) two even blocks so dimension_semantics
        # ("parallel",) can shard the grid across v7x's 2 TensorCores.
        tile = _round_up(pl.cdiv(rows, 2), _SUBLANES)
    else:
        tile = max_rows
    return min(tile, max_rows)


def _pallas_class_major(x, w_flat, b_flat, *, max_rows_per_block):
    """Lane-dense class-major logits: [num_classes, ceil(N/128)*128] f32.

    Padded tail entries (beyond N) hold w*0 + b = bias; callers ignore/slice.
    """
    n = x.shape[0]
    num_classes = w_flat.shape[0]

    rows = pl.cdiv(n, LANES)
    n_pad = rows * LANES

    x_flat = x.reshape(-1).astype(jnp.float32)
    if n_pad != n:
        # Pads by < 128 elements only; the ragged last grid block handles the
        # rest (no padding of x to a tile multiple).
        x_flat = jnp.pad(x_flat, (0, n_pad - n))
    x2d = x_flat.reshape(rows, LANES)

    tile_rows = _pick_tile_rows(rows, max_rows_per_block)
    grid = (pl.cdiv(rows, tile_rows),)

    # Explicit VMEM budget (v7x has 64 MiB physical / 32 MiB scoped default):
    # per-step blocks = (1 input + C output), double buffered.
    step_bytes = (1 + num_classes) * tile_rows * LANES * 4
    vmem_limit = int(min(32 * 1024 * 1024, 2 * step_bytes + 8 * 1024 * 1024))

    out3d = pl.pallas_call(
        _linear_kernel,
        out_shape=jax.ShapeDtypeStruct((num_classes, rows, LANES),
                                       jnp.float32),
        grid=grid,
        in_specs=[
            # Tiny per-class scalars stay on the scalar path.
            pl.BlockSpec(memory_space=pltpu.MemorySpace.SMEM),   # weight [C]
            pl.BlockSpec(memory_space=pltpu.MemorySpace.SMEM),   # bias   [C]
            pl.BlockSpec((tile_rows, LANES), lambda i: (i, 0)),  # x slab
        ],
        out_specs=pl.BlockSpec((num_classes, tile_rows, LANES),
                               lambda i: (0, i, 0)),
        compiler_params=pltpu.CompilerParams(
            dimension_semantics=("parallel",),
            vmem_limit_bytes=vmem_limit),
    )(w_flat, b_flat, x2d)

    return out3d.reshape(num_classes, n_pad)


@functools.partial(jax.jit, static_argnames=("max_rows_per_block",))
def net_forward_class_major(x, weight, bias, *,
                            max_rows_per_block=_MAX_TILE_ROWS):
    """Zero-extra-copy output: class-major lane-dense [C, ceil(N/128)*128]."""
    num_classes = weight.shape[0]
    w_flat = weight.reshape(num_classes).astype(jnp.float32)
    b_flat = bias.reshape(num_classes).astype(jnp.float32)
    return _pallas_class_major(x, w_flat, b_flat,
                               max_rows_per_block=max_rows_per_block)


@functools.partial(jax.jit,
                   static_argnames=("max_rows_per_block", "min_pallas_batch"))
def net_forward(x, weight, bias, *, max_rows_per_block=_MAX_TILE_ROWS,
                min_pallas_batch=_MIN_PALLAS_BATCH):
    """Forward pass of Net (nn.Linear(1, num_classes)). Returns [N, C] f32."""
    n, in_features = x.shape
    assert in_features == 1, "Net.fc1 has in_features == 1"
    num_classes = weight.shape[0]

    w_flat = weight.reshape(num_classes).astype(jnp.float32)
    b_flat = bias.reshape(num_classes).astype(jnp.float32)

    if n < min_pallas_batch:
        # Real Wisconsin batch (N=569): kernel dispatch + layout plumbing
        # dominates; a single fused XLA affine wins.
        return x.astype(jnp.float32) * w_flat[None, :] + b_flat[None, :]

    slab = _pallas_class_major(x, w_flat, b_flat,
                               max_rows_per_block=max_rows_per_block)
    # PyTorch-compatible [N, C] layout (one transpose, fused under jit).
    # Callers that can consume the class-major slab should use
    # net_forward_class_major to skip this relayout entirely.
    return slab[:, :n].T


if __name__ == "__main__":
    key = jax.random.PRNGKey(0)
    k_x, k_w, k_b = jax.random.split(key, 3)

    # nn.Linear(1, C) init: U(-1/sqrt(fan_in), +) with fan_in = 1 -> U(-1, 1).
    weight = jax.random.uniform(k_w, (NUM_CLASSES, 1), jnp.float32, -1.0, 1.0)
    bias = jax.random.uniform(k_b, (NUM_CLASSES,), jnp.float32, -1.0, 1.0)

    # --- small shape consistent with the module (batch=8, in_features=1),
    #     forced through the Pallas path ---
    x = jax.random.normal(k_x, (8, 1), dtype=jnp.float32)
    out = jax.block_until_ready(
        net_forward(x, weight, bias, min_pallas_batch=0))
    ref = x @ weight.T + bias
    assert out.shape == (8, NUM_CLASSES)
    assert jnp.allclose(out, ref, atol=1e-5), "mismatch (small, pallas path)"

    # --- Wisconsin-sized batch: takes the fused-XLA fast path ---
    x_w = jax.random.normal(k_x, (569, 1), dtype=jnp.float32)
    out_w = jax.block_until_ready(net_forward(x_w, weight, bias))
    assert jnp.allclose(out_w, x_w @ weight.T + bias, atol=1e-5), \
        "mismatch (Wisconsin-size fast path)"

    # --- larger batch: Pallas path, 2-way split grid + ragged last block
    #     (40000 samples -> 313 rows of 128 lanes) ---
    x_l = jax.random.normal(k_x, (40000, 1), dtype=jnp.float32)
    out_l = jax.block_until_ready(net_forward(x_l, weight, bias))
    assert out_l.shape == (40000, NUM_CLASSES)
    assert jnp.allclose(out_l, x_l @ weight.T + bias, atol=1e-5), \
        "mismatch (large, default tiles)"

    # --- class-major lane-dense output (no wrapper transpose) ---
    slab = jax.block_until_ready(net_forward_class_major(x_l, weight, bias))
    ref_slab = x_l.reshape(-1)[None, :] * weight.reshape(-1, 1) + bias[:, None]
    assert slab.shape == (NUM_CLASSES, 40064)
    assert jnp.allclose(slab[:, :40000], ref_slab, atol=1e-5), \
        "mismatch (class-major slab)"

    # --- multi-step pipelined grid (3 blocks of 128 rows, last ragged) ---
    out_t = jax.block_until_ready(
        net_forward(x_l, weight, bias, max_rows_per_block=128))
    assert jnp.allclose(out_t, x_l @ weight.T + bias, atol=1e-5), \
        "mismatch (large, tiled grid)"

    print("KERNEL_OK")
</pallas_src>

<mosaic_0001>
module attributes {stable_mosaic.version = 11 : i64} {
  func.func @_linear_kernel(%arg0: i32, %arg1: memref<2xf32, #tpu.memory_space<smem>>, %arg2: memref<2xf32, #tpu.memory_space<smem>>, %arg3: memref<1x128xf32, #tpu.memory_space<vmem>>, %arg4: memref<2x1x128xf32, #tpu.memory_space<vmem>>) attributes {dimension_semantics = [#tpu.dimension_semantics<parallel>], iteration_bounds = array<i64: 1>, scalar_prefetch = 0 : i64, scratch_operands = 0 : i64, tpu.core_type = #tpu.core_type<tc>, window_params = [{transform_indices = @transform_0, window_bounds = array<i64: 2>}, {transform_indices = @transform_1, window_bounds = array<i64: 2>}, {transform_indices = @transform_2, window_bounds = array<i64: 1, 128>}, {transform_indices = @transform_3, window_bounds = array<i64: 2, 1, 128>}]} {
    %c0 = arith.constant 0 : index
    %c0_0 = arith.constant 0 : index
    %0 = vector.load %arg3[%c0, %c0_0] : memref<1x128xf32, #tpu.memory_space<vmem>>, vector<1x128xf32>
    %c0_1 = arith.constant 0 : index
    %1 = memref.load %arg1[%c0_1] : memref<2xf32, #tpu.memory_space<smem>>
    %2 = vector.broadcast %1 : f32 to vector<1x128xf32>
    %3 = arith.mulf %0, %2 : vector<1x128xf32>
    %c0_2 = arith.constant 0 : index
    %4 = memref.load %arg2[%c0_2] : memref<2xf32, #tpu.memory_space<smem>>
    %5 = vector.broadcast %4 : f32 to vector<1x128xf32>
    %6 = arith.addf %3, %5 : vector<1x128xf32>
    %c0_3 = arith.constant 0 : index
    %c0_4 = arith.constant 0 : index
    %c0_5 = arith.constant 0 : index
    %7 = vector.load %arg4[%c0_3, %c0_4, %c0_5] : memref<2x1x128xf32, #tpu.memory_space<vmem>>, vector<1x1x128xf32>
    %8 = vector.shape_cast %7 : vector<1x1x128xf32> to vector<1x128xf32>
    %9 = vector.shape_cast %6 : vector<1x128xf32> to vector<1x1x128xf32>
    tpu.vector_store %arg4[%c0_3, %c0_4, %c0_5], %9 {strides = array<i32>} : memref<2x1x128xf32, #tpu.memory_space<vmem>>, vector<1x1x128xf32>,
    %c1 = arith.constant 1 : index
    %10 = memref.load %arg1[%c1] : memref<2xf32, #tpu.memory_space<smem>>
    %11 = vector.broadcast %10 : f32 to vector<1x128xf32>
    %12 = arith.mulf %0, %11 : vector<1x128xf32>
    %c1_6 = arith.constant 1 : index
    %13 = memref.load %arg2[%c1_6] : memref<2xf32, #tpu.memory_space<smem>>
    %14 = vector.broadcast %13 : f32 to vector<1x128xf32>
    %15 = arith.addf %12, %14 : vector<1x128xf32>
    %c1_7 = arith.constant 1 : index
    %c0_8 = arith.constant 0 : index
    %c0_9 = arith.constant 0 : index
    %16 = vector.load %arg4[%c1_7, %c0_8, %c0_9] : memref<2x1x128xf32, #tpu.memory_space<vmem>>, vector<1x1x128xf32>
    %17 = vector.shape_cast %16 : vector<1x1x128xf32> to vector<1x128xf32>
    %18 = vector.shape_cast %15 : vector<1x128xf32> to vector<1x1x128xf32>
    tpu.vector_store %arg4[%c1_7, %c0_8, %c0_9], %18 {strides = array<i32>} : memref<2x1x128xf32, #tpu.memory_space<vmem>>, vector<1x1x128xf32>,
    return
  }
  func.func @transform_0(%arg0: i32) -> i32 {
    %c0_i32 = arith.constant 0 : i32
    %c0_i32_0 = arith.constant 0 : i32
    return %c0_i32 : i32
  }
  func.func @transform_1(%arg0: i32) -> i32 {
    %c0_i32 = arith.constant 0 : i32
    %c0_i32_0 = arith.constant 0 : i32
    return %c0_i32 : i32
  }
  func.func @transform_2(%arg0: i32) -> (i32, i32) {
    %c0_i32 = arith.constant 0 : i32
    %c0_i32_0 = arith.constant 0 : i32
    return %arg0, %c0_i32 : i32, i32
  }
  func.func @transform_3(%arg0: i32) -> (i32, i32, i32) {
    %c0_i32 = arith.constant 0 : i32
    %c0_i32_0 = arith.constant 0 : i32
    %c0_i32_1 = arith.constant 0 : i32
    return %c0_i32, %arg0, %c0_i32_0 : i32, i32, i32
  }
}

</mosaic_0001>

<llo_original>
// kernel: net_forward.1
$region0: #{net_forward.1}
  #allocation0 [shape = 'u32[]', space=smem, size = 0x4, offset = 0x4, fixed_abs, tag = 'smem constant byte address 0x4 - core index']
  #allocation1 [shape = 'u32[144,128]{1,0:T(1,128)}', space=vmem, size = 0x12000, scoped, tag = 'internal scratch']
  %s0 = inlined_call_operand.vmem [shape: f32[2], index: 0, kind: input, shape index: {}]
  %s1 = inlined_call_operand.vmem [shape: f32[2], index: 1, kind: input, shape index: {}]
  %s2 = inlined_call_operand.vmem [shape: f32[1,128], index: 2, kind: input, shape index: {}]
  %s3 = inlined_call_operand.vmem [shape: f32[2,1,128], index: 3, kind: output, shape index: {}]
  %s4 = sld [smem:[#allocation0]]
  $region30: #{net_forward.1} parent=0
    _
  %s6 = ssub.s32 1, %s4
  %s7 = scalar_select 0, %s6, %s4
  $region1: #{net_forward.1} parent=0
    #allocation2 [shape = 'u8[512]{0}', space=smem, size = 0x200, scoped, tag = 'input window, operand 0, single buffered']
    #allocation3 [shape = 's32[1]{0}', space=sflag, size = 0x4, scoped, tag = 'scoped memory for net_forward.1']
    #allocation4 [shape = 'u8[512]{0}', space=smem, size = 0x200, scoped, tag = 'input window, operand 1, single buffered']
    #allocation5 [shape = 's32[1]{0}', space=sflag, size = 0x4, scoped, tag = 'scoped memory for net_forward.1']
    %8 = vsyncpa [#allocation3], 0
    %9 = vsyncpa [#allocation5], 0
    // Predicated region
    $region2: #{net_forward.1} parent=1 // pred_check
      _
    $region3: #{net_forward.1} parent=1 // pred_check_branch
      %11 = sbr.rel (0) target = $region5
    $region4: #{net_forward.1} parent=1 // pred_region
      %s13 = ssub.s32 16, 16
      %14 = vsyncadd [#allocation3], %s13
      %s16 = sshll.u32 %s0, 4
      %s17 = int_to_ptr.vmem [resolvable:$true] %s16
      %19 = dma.vmem_to_smem %s17, 16, [#allocation2], [#allocation3]
    $region5: #{net_forward.1} parent=1 // pred_fallthru
      _
    // Predicated region
    $region6: #{net_forward.1} parent=1 // pred_check
      _
    $region7: #{net_forward.1} parent=1 // pred_check_branch
      %21 = sbr.rel (0) target = $region9
    $region8: #{net_forward.1} parent=1 // pred_region
      %s23 = ssub.s32 16, 16
      %24 = vsyncadd [#allocation5], %s23
      %s26 = sshll.u32 %s1, 4
      %s27 = int_to_ptr.vmem [resolvable:$true] %s26
      %29 = dma.vmem_to_smem %s27, 16, [#allocation4], [#allocation5]
    $region9: #{net_forward.1} parent=1 // pred_fallthru
      _
    // Predicated region
    $region10: #{net_forward.1} parent=1 // pred_check
      _
    $region11: #{net_forward.1} parent=1 // pred_check_branch
      %31 = sbr.rel (0) target = $region13
    $region12: #{net_forward.1} parent=1 // pred_region
      _
    $region13: #{net_forward.1} parent=1 // pred_fallthru
      _
    // Predicated region
    $region14: #{net_forward.1} parent=1 // pred_check
      _
    $region15: #{net_forward.1} parent=1 // pred_check_branch
      %33 = sbr.rel (0) target = $region17
    $region16: #{net_forward.1} parent=1 // pred_region
      %34 = dma.done [#allocation3], 16
    $region17: #{net_forward.1} parent=1 // pred_fallthru
      _
    // Predicated region
    $region18: #{net_forward.1} parent=1 // pred_check
      _
    $region19: #{net_forward.1} parent=1 // pred_check_branch
      %36 = sbr.rel (0) target = $region21
    $region20: #{net_forward.1} parent=1 // pred_region
      %37 = dma.done [#allocation5], 16
    $region21: #{net_forward.1} parent=1 // pred_fallthru
      _
    %38 = sfence
    %v39 = vld [vmem:[%s2] sm:$0x1]
    %s40 = sld [smem:[#allocation2]]
    %v41 = vstv %s40
    %v42 = vmul.f32 %v39, %v41
    %s43 = sld [smem:[#allocation4]]
    %v44 = vstv %s43
    %v45 = vadd.f32 %v42, %v44
    %46 = vst [vmem:[%s3] sm:$0x1] %v45
    %s47 = sld [smem:[#allocation2 + $0x1]]
    %v48 = vstv %s47
    %v49 = vmul.f32 %v39, %v48
    %s50 = sld [smem:[#allocation4 + $0x1]]
    %v51 = vstv %s50
    %v52 = vadd.f32 %v49, %v51
    %s53 = scalar_lea.vmem %s3, 1
    %54 = vst [vmem:[%s53] sm:$0x1] %v52
    // Predicated region
    $region22: #{net_forward.1} parent=1 // pred_check
      _
    $region23: #{net_forward.1} parent=1 // pred_check_branch
      %56 = sbr.rel (0) target = $region25
    $region24: #{net_forward.1} parent=1 // pred_region
      _
    $region25: #{net_forward.1} parent=1 // pred_fallthru
      _
    // Predicated region
    $region26: #{net_forward.1} parent=1 // pred_check
      _
    $region27: #{net_forward.1} parent=1 // pred_check_branch
      %58 = sbr.rel (0) target = $region29
    $region28: #{net_forward.1} parent=1 // pred_region
      _
    $region29: #{net_forward.1} parent=1 // pred_fallthru
      _
    %59 = vsyncpa [#allocation3], 1
    %60 = vsyncpa [#allocation5], 1

</llo_original>
